<compile_context>
chip_gen: v7x
topology: tpu7x:2x2x1
jax: 0.10.0
libtpu: 0.0.40
codegen_flags: <defaults>
</compile_context>

<pallas_src>
import jax
import jax.numpy as jnp
from jax.experimental import pallas as pl
from jax.experimental.pallas import tpu as pltpu


def _outconv_kernel(w_ref, b_ref, x_ref, o_ref):
    # w_ref: SMEM (C_out, C_in) f32    b_ref: SMEM (C_out,) f32
    # x_ref: VMEM (1, C_in, TS, 128)   o_ref: VMEM (1, C_out, TS, 128)
    c_in = x_ref.shape[1]
    c_out = o_ref.shape[1]

    # Tiny channel loops, fully unrolled.  One (TS, 128) accumulator live at a
    # time; input planes are loaded from the ref right where they are used and
    # each output plane is stored directly (no concatenate).
    for co in range(c_out):
        acc = x_ref[0, 0, :, :].astype(jnp.float32) * w_ref[co, 0]
        for ci in range(1, c_in):
            acc = acc + x_ref[0, ci, :, :].astype(jnp.float32) * w_ref[co, ci]
        o_ref[0, co, :, :] = (acc + b_ref[co]).astype(o_ref.dtype)


def _pick_row_tile(n_rows, c_in, itemsize, n_batch, target_block_bytes):
    """Rows (of 128 lanes each) per block along the flattened-spatial axis.

    Returns either the full extent `n_rows` or a multiple of 8 (ragged last
    block is masked by Pallas — cheaper than shrinking to a tiny exact
    divisor).  When batch == 1 the spatial axis is split into >= 2 tiles so a
    2-TensorCore chip (v7x) keeps both cores busy.
    """
    rows = max(8, (target_block_bytes // (c_in * 128 * itemsize)) // 8 * 8)
    if rows >= n_rows:
        if n_batch == 1 and n_rows >= 16:
            return ((pl.cdiv(n_rows, 2) + 7) // 8) * 8   # >= 2 spatial tiles
        return n_rows                                    # full extent (legal block)
    return rows


def outconv_pallas(x, weight, bias, *, target_block_bytes=6 * 1024 * 1024):
    """1x1x1 Conv3d forward (matches PyTorch OutConv).

    x:      (N, C_in, D, H, W)
    weight: (C_out, C_in, 1, 1, 1)   (PyTorch Conv3d weight layout)
    bias:   (C_out,)
    returns (N, C_out, D, H, W)
    """
    N, C_in, D, H, W = x.shape
    C_out = weight.shape[0]
    S = D * H * W

    # Tiny parameters -> SMEM scalars inside the kernel.
    w2d = weight.reshape(C_out, C_in).astype(jnp.float32)    # (C_out, C_in)
    b1d = bias.reshape(C_out).astype(jnp.float32)            # (C_out,)

    # Dense (sublane, lane) spatial layout: (N, C_in, R, 128).
    R = pl.cdiv(S, 128)
    S_pad = R * 128
    x3 = x.reshape(N, C_in, S)
    if S_pad != S:
        # TODO(synk): pad-copy fallback only for awkward spatial extents
        # (S % 128 != 0); divisible shapes take the zero-copy reshape path.
        x3 = jnp.pad(x3, ((0, 0), (0, 0), (0, S_pad - S)))
    x4 = x3.reshape(N, C_in, R, 128)

    itemsize = jnp.dtype(x.dtype).itemsize
    TS = _pick_row_tile(R, C_in, itemsize, N, target_block_bytes)
    grid = (N, pl.cdiv(R, TS))

    # Double-buffered (in + out) blocks plus headroom; capped for v7x's 64 MiB
    # VMEM, lifted above the 16/32 MiB scoped defaults on v5e/v6e.
    buf_bytes = 2 * (C_in + C_out) * TS * 128 * itemsize
    vmem_limit = int(min(48 * 1024 * 1024,
                         max(32 * 1024 * 1024, buf_bytes + 16 * 1024 * 1024)))

    out4 = pl.pallas_call(
        _outconv_kernel,
        out_shape=jax.ShapeDtypeStruct((N, C_out, R, 128), x.dtype),
        grid=grid,
        in_specs=[
            pl.BlockSpec(memory_space=pltpu.MemorySpace.SMEM),          # weight
            pl.BlockSpec(memory_space=pltpu.MemorySpace.SMEM),          # bias
            pl.BlockSpec((1, C_in, TS, 128), lambda n, s: (n, 0, s, 0)),  # x tile
        ],
        out_specs=pl.BlockSpec((1, C_out, TS, 128), lambda n, s: (n, 0, s, 0)),
        compiler_params=pltpu.CompilerParams(
            dimension_semantics=("parallel", "parallel"),
            vmem_limit_bytes=vmem_limit,
        ),
    )(w2d, b1d, x4)

    out3 = out4.reshape(N, C_out, S_pad)
    if S_pad != S:
        out3 = out3[:, :, :S]
    return out3.reshape(N, C_out, D, H, W)


if __name__ == "__main__":
    key = jax.random.PRNGKey(0)
    k_x, k_w, k_b = jax.random.split(key, 3)

    # Shapes consistent with OutConv: Conv3d(in_channels=4, out_channels=3, k=1)
    N, C_in, C_out = 2, 4, 3
    weight = jax.random.normal(k_w, (C_out, C_in, 1, 1, 1), dtype=jnp.float32) * 0.1
    bias = jax.random.normal(k_b, (C_out,), dtype=jnp.float32) * 0.1

    def reference(x):
        return (jnp.einsum("ncdhw,oc->nodhw", x, weight.reshape(C_out, C_in))
                + bias.reshape(1, C_out, 1, 1, 1))

    # Case 1: spatial extent divisible by 128 (8*8*8 = 512) -> zero-copy path.
    x1 = jax.random.normal(k_x, (N, C_in, 8, 8, 8), dtype=jnp.float32)
    y1 = outconv_pallas(x1, weight, bias)
    jax.block_until_ready(y1)
    assert y1.shape == (N, C_out, 8, 8, 8)
    assert jnp.allclose(y1, reference(x1), atol=1e-5, rtol=1e-5)

    # Case 2: ragged spatial extent (5*6*7 = 210, not a multiple of 128)
    # -> exercises the pad / slice fallback path.
    x2 = jax.random.normal(k_x, (N, C_in, 5, 6, 7), dtype=jnp.float32)
    y2 = outconv_pallas(x2, weight, bias)
    jax.block_until_ready(y2)
    assert y2.shape == (N, C_out, 5, 6, 7)
    assert jnp.allclose(y2, reference(x2), atol=1e-5, rtol=1e-5)

    print("KERNEL_OK")
</pallas_src>

<mosaic_0001>
module attributes {stable_mosaic.version = 11 : i64} {
  func.func @_outconv_kernel(%arg0: i32, %arg1: i32, %arg2: memref<3x4xf32, #tpu.memory_space<smem>>, %arg3: memref<3xf32, #tpu.memory_space<smem>>, %arg4: memref<1x4x4x128xf32, #tpu.memory_space<vmem>>, %arg5: memref<1x3x4x128xf32, #tpu.memory_space<vmem>>) attributes {dimension_semantics = [#tpu.dimension_semantics<parallel>, #tpu.dimension_semantics<parallel>], iteration_bounds = array<i64: 2, 1>, scalar_prefetch = 0 : i64, scratch_operands = 0 : i64, tpu.core_type = #tpu.core_type<tc>, window_params = [{transform_indices = @transform_0, window_bounds = array<i64: 3, 4>}, {transform_indices = @transform_1, window_bounds = array<i64: 3>}, {transform_indices = @transform_2, window_bounds = array<i64: 1, 4, 4, 128>}, {transform_indices = @transform_3, window_bounds = array<i64: 1, 3, 4, 128>}]} {
    %c0 = arith.constant 0 : index
    %c0_0 = arith.constant 0 : index
    %c0_1 = arith.constant 0 : index
    %c0_2 = arith.constant 0 : index
    %0 = vector.load %arg4[%c0, %c0_0, %c0_1, %c0_2] : memref<1x4x4x128xf32, #tpu.memory_space<vmem>>, vector<1x1x4x128xf32>
    %1 = vector.shape_cast %0 : vector<1x1x4x128xf32> to vector<4x128xf32>
    %c0_3 = arith.constant 0 : index
    %c0_4 = arith.constant 0 : index
    %2 = memref.load %arg2[%c0_3, %c0_4] : memref<3x4xf32, #tpu.memory_space<smem>>
    %3 = vector.broadcast %2 : f32 to vector<4x128xf32>
    %4 = arith.mulf %1, %3 : vector<4x128xf32>
    %c0_5 = arith.constant 0 : index
    %c1 = arith.constant 1 : index
    %c0_6 = arith.constant 0 : index
    %c0_7 = arith.constant 0 : index
    %5 = vector.load %arg4[%c0_5, %c1, %c0_6, %c0_7] : memref<1x4x4x128xf32, #tpu.memory_space<vmem>>, vector<1x1x4x128xf32>
    %6 = vector.shape_cast %5 : vector<1x1x4x128xf32> to vector<4x128xf32>
    %c0_8 = arith.constant 0 : index
    %c1_9 = arith.constant 1 : index
    %7 = memref.load %arg2[%c0_8, %c1_9] : memref<3x4xf32, #tpu.memory_space<smem>>
    %8 = vector.broadcast %7 : f32 to vector<4x128xf32>
    %9 = arith.mulf %6, %8 : vector<4x128xf32>
    %10 = arith.addf %4, %9 : vector<4x128xf32>
    %c0_10 = arith.constant 0 : index
    %c2 = arith.constant 2 : index
    %c0_11 = arith.constant 0 : index
    %c0_12 = arith.constant 0 : index
    %11 = vector.load %arg4[%c0_10, %c2, %c0_11, %c0_12] : memref<1x4x4x128xf32, #tpu.memory_space<vmem>>, vector<1x1x4x128xf32>
    %12 = vector.shape_cast %11 : vector<1x1x4x128xf32> to vector<4x128xf32>
    %c0_13 = arith.constant 0 : index
    %c2_14 = arith.constant 2 : index
    %13 = memref.load %arg2[%c0_13, %c2_14] : memref<3x4xf32, #tpu.memory_space<smem>>
    %14 = vector.broadcast %13 : f32 to vector<4x128xf32>
    %15 = arith.mulf %12, %14 : vector<4x128xf32>
    %16 = arith.addf %10, %15 : vector<4x128xf32>
    %c0_15 = arith.constant 0 : index
    %c3 = arith.constant 3 : index
    %c0_16 = arith.constant 0 : index
    %c0_17 = arith.constant 0 : index
    %17 = vector.load %arg4[%c0_15, %c3, %c0_16, %c0_17] : memref<1x4x4x128xf32, #tpu.memory_space<vmem>>, vector<1x1x4x128xf32>
    %18 = vector.shape_cast %17 : vector<1x1x4x128xf32> to vector<4x128xf32>
    %c0_18 = arith.constant 0 : index
    %c3_19 = arith.constant 3 : index
    %19 = memref.load %arg2[%c0_18, %c3_19] : memref<3x4xf32, #tpu.memory_space<smem>>
    %20 = vector.broadcast %19 : f32 to vector<4x128xf32>
    %21 = arith.mulf %18, %20 : vector<4x128xf32>
    %22 = arith.addf %16, %21 : vector<4x128xf32>
    %c0_20 = arith.constant 0 : index
    %23 = memref.load %arg3[%c0_20] : memref<3xf32, #tpu.memory_space<smem>>
    %24 = vector.broadcast %23 : f32 to vector<4x128xf32>
    %25 = arith.addf %22, %24 : vector<4x128xf32>
    %c0_21 = arith.constant 0 : index
    %c0_22 = arith.constant 0 : index
    %c0_23 = arith.constant 0 : index
    %c0_24 = arith.constant 0 : index
    %26 = vector.load %arg5[%c0_21, %c0_22, %c0_23, %c0_24] : memref<1x3x4x128xf32, #tpu.memory_space<vmem>>, vector<1x1x4x128xf32>
    %27 = vector.shape_cast %26 : vector<1x1x4x128xf32> to vector<4x128xf32>
    %28 = vector.shape_cast %25 : vector<4x128xf32> to vector<1x1x4x128xf32>
    tpu.vector_store %arg5[%c0_21, %c0_22, %c0_23, %c0_24], %28 {strides = array<i32>} : memref<1x3x4x128xf32, #tpu.memory_space<vmem>>, vector<1x1x4x128xf32>,
    %c0_25 = arith.constant 0 : index
    %c0_26 = arith.constant 0 : index
    %c0_27 = arith.constant 0 : index
    %c0_28 = arith.constant 0 : index
    %29 = vector.load %arg4[%c0_25, %c0_26, %c0_27, %c0_28] : memref<1x4x4x128xf32, #tpu.memory_space<vmem>>, vector<1x1x4x128xf32>
    %30 = vector.shape_cast %29 : vector<1x1x4x128xf32> to vector<4x128xf32>
    %c1_29 = arith.constant 1 : index
    %c0_30 = arith.constant 0 : index
    %31 = memref.load %arg2[%c1_29, %c0_30] : memref<3x4xf32, #tpu.memory_space<smem>>
    %32 = vector.broadcast %31 : f32 to vector<4x128xf32>
    %33 = arith.mulf %30, %32 : vector<4x128xf32>
    %c0_31 = arith.constant 0 : index
    %c1_32 = arith.constant 1 : index
    %c0_33 = arith.constant 0 : index
    %c0_34 = arith.constant 0 : index
    %34 = vector.load %arg4[%c0_31, %c1_32, %c0_33, %c0_34] : memref<1x4x4x128xf32, #tpu.memory_space<vmem>>, vector<1x1x4x128xf32>
    %35 = vector.shape_cast %34 : vector<1x1x4x128xf32> to vector<4x128xf32>
    %c1_35 = arith.constant 1 : index
    %c1_36 = arith.constant 1 : index
    %36 = memref.load %arg2[%c1_35, %c1_36] : memref<3x4xf32, #tpu.memory_space<smem>>
    %37 = vector.broadcast %36 : f32 to vector<4x128xf32>
    %38 = arith.mulf %35, %37 : vector<4x128xf32>
    %39 = arith.addf %33, %38 : vector<4x128xf32>
    %c0_37 = arith.constant 0 : index
    %c2_38 = arith.constant 2 : index
    %c0_39 = arith.constant 0 : index
    %c0_40 = arith.constant 0 : index
    %40 = vector.load %arg4[%c0_37, %c2_38, %c0_39, %c0_40] : memref<1x4x4x128xf32, #tpu.memory_space<vmem>>, vector<1x1x4x128xf32>
    %41 = vector.shape_cast %40 : vector<1x1x4x128xf32> to vector<4x128xf32>
    %c1_41 = arith.constant 1 : index
    %c2_42 = arith.constant 2 : index
    %42 = memref.load %arg2[%c1_41, %c2_42] : memref<3x4xf32, #tpu.memory_space<smem>>
    %43 = vector.broadcast %42 : f32 to vector<4x128xf32>
    %44 = arith.mulf %41, %43 : vector<4x128xf32>
    %45 = arith.addf %39, %44 : vector<4x128xf32>
    %c0_43 = arith.constant 0 : index
    %c3_44 = arith.constant 3 : index
    %c0_45 = arith.constant 0 : index
    %c0_46 = arith.constant 0 : index
    %46 = vector.load %arg4[%c0_43, %c3_44, %c0_45, %c0_46] : memref<1x4x4x128xf32, #tpu.memory_space<vmem>>, vector<1x1x4x128xf32>
    %47 = vector.shape_cast %46 : vector<1x1x4x128xf32> to vector<4x128xf32>
    %c1_47 = arith.constant 1 : index
    %c3_48 = arith.constant 3 : index
    %48 = memref.load %arg2[%c1_47, %c3_48] : memref<3x4xf32, #tpu.memory_space<smem>>
    %49 = vector.broadcast %48 : f32 to vector<4x128xf32>
    %50 = arith.mulf %47, %49 : vector<4x128xf32>
    %51 = arith.addf %45, %50 : vector<4x128xf32>
    %c1_49 = arith.constant 1 : index
    %52 = memref.load %arg3[%c1_49] : memref<3xf32, #tpu.memory_space<smem>>
    %53 = vector.broadcast %52 : f32 to vector<4x128xf32>
    %54 = arith.addf %51, %53 : vector<4x128xf32>
    %c0_50 = arith.constant 0 : index
    %c1_51 = arith.constant 1 : index
    %c0_52 = arith.constant 0 : index
    %c0_53 = arith.constant 0 : index
    %55 = vector.load %arg5[%c0_50, %c1_51, %c0_52, %c0_53] : memref<1x3x4x128xf32, #tpu.memory_space<vmem>>, vector<1x1x4x128xf32>
    %56 = vector.shape_cast %55 : vector<1x1x4x128xf32> to vector<4x128xf32>
    %57 = vector.shape_cast %54 : vector<4x128xf32> to vector<1x1x4x128xf32>
    tpu.vector_store %arg5[%c0_50, %c1_51, %c0_52, %c0_53], %57 {strides = array<i32>} : memref<1x3x4x128xf32, #tpu.memory_space<vmem>>, vector<1x1x4x128xf32>,
    %c0_54 = arith.constant 0 : index
    %c0_55 = arith.constant 0 : index
    %c0_56 = arith.constant 0 : index
    %c0_57 = arith.constant 0 : index
    %58 = vector.load %arg4[%c0_54, %c0_55, %c0_56, %c0_57] : memref<1x4x4x128xf32, #tpu.memory_space<vmem>>, vector<1x1x4x128xf32>
    %59 = vector.shape_cast %58 : vector<1x1x4x128xf32> to vector<4x128xf32>
    %c2_58 = arith.constant 2 : index
    %c0_59 = arith.constant 0 : index
    %60 = memref.load %arg2[%c2_58, %c0_59] : memref<3x4xf32, #tpu.memory_space<smem>>
    %61 = vector.broadcast %60 : f32 to vector<4x128xf32>
    %62 = arith.mulf %59, %61 : vector<4x128xf32>
    %c0_60 = arith.constant 0 : index
    %c1_61 = arith.constant 1 : index
    %c0_62 = arith.constant 0 : index
    %c0_63 = arith.constant 0 : index
    %63 = vector.load %arg4[%c0_60, %c1_61, %c0_62, %c0_63] : memref<1x4x4x128xf32, #tpu.memory_space<vmem>>, vector<1x1x4x128xf32>
    %64 = vector.shape_cast %63 : vector<1x1x4x128xf32> to vector<4x128xf32>
    %c2_64 = arith.constant 2 : index
    %c1_65 = arith.constant 1 : index
    %65 = memref.load %arg2[%c2_64, %c1_65] : memref<3x4xf32, #tpu.memory_space<smem>>
    %66 = vector.broadcast %65 : f32 to vector<4x128xf32>
    %67 = arith.mulf %64, %66 : vector<4x128xf32>
    %68 = arith.addf %62, %67 : vector<4x128xf32>
    %c0_66 = arith.constant 0 : index
    %c2_67 = arith.constant 2 : index
    %c0_68 = arith.constant 0 : index
    %c0_69 = arith.constant 0 : index
    %69 = vector.load %arg4[%c0_66, %c2_67, %c0_68, %c0_69] : memref<1x4x4x128xf32, #tpu.memory_space<vmem>>, vector<1x1x4x128xf32>
    %70 = vector.shape_cast %69 : vector<1x1x4x128xf32> to vector<4x128xf32>
    %c2_70 = arith.constant 2 : index
    %c2_71 = arith.constant 2 : index
    %71 = memref.load %arg2[%c2_70, %c2_71] : memref<3x4xf32, #tpu.memory_space<smem>>
    %72 = vector.broadcast %71 : f32 to vector<4x128xf32>
    %73 = arith.mulf %70, %72 : vector<4x128xf32>
    %74 = arith.addf %68, %73 : vector<4x128xf32>
    %c0_72 = arith.constant 0 : index
    %c3_73 = arith.constant 3 : index
    %c0_74 = arith.constant 0 : index
    %c0_75 = arith.constant 0 : index
    %75 = vector.load %arg4[%c0_72, %c3_73, %c0_74, %c0_75] : memref<1x4x4x128xf32, #tpu.memory_space<vmem>>, vector<1x1x4x128xf32>
    %76 = vector.shape_cast %75 : vector<1x1x4x128xf32> to vector<4x128xf32>
    %c2_76 = arith.constant 2 : index
    %c3_77 = arith.constant 3 : index
    %77 = memref.load %arg2[%c2_76, %c3_77] : memref<3x4xf32, #tpu.memory_space<smem>>
    %78 = vector.broadcast %77 : f32 to vector<4x128xf32>
    %79 = arith.mulf %76, %78 : vector<4x128xf32>
    %80 = arith.addf %74, %79 : vector<4x128xf32>
    %c2_78 = arith.constant 2 : index
    %81 = memref.load %arg3[%c2_78] : memref<3xf32, #tpu.memory_space<smem>>
    %82 = vector.broadcast %81 : f32 to vector<4x128xf32>
    %83 = arith.addf %80, %82 : vector<4x128xf32>
    %c0_79 = arith.constant 0 : index
    %c2_80 = arith.constant 2 : index
    %c0_81 = arith.constant 0 : index
    %c0_82 = arith.constant 0 : index
    %84 = vector.load %arg5[%c0_79, %c2_80, %c0_81, %c0_82] : memref<1x3x4x128xf32, #tpu.memory_space<vmem>>, vector<1x1x4x128xf32>
    %85 = vector.shape_cast %84 : vector<1x1x4x128xf32> to vector<4x128xf32>
    %86 = vector.shape_cast %83 : vector<4x128xf32> to vector<1x1x4x128xf32>
    tpu.vector_store %arg5[%c0_79, %c2_80, %c0_81, %c0_82], %86 {strides = array<i32>} : memref<1x3x4x128xf32, #tpu.memory_space<vmem>>, vector<1x1x4x128xf32>,
    return
  }
  func.func @transform_0(%arg0: i32, %arg1: i32) -> (i32, i32) {
    %c0_i32 = arith.constant 0 : i32
    %c0_i32_0 = arith.constant 0 : i32
    %c0_i32_1 = arith.constant 0 : i32
    return %c0_i32, %c0_i32_0 : i32, i32
  }
  func.func @transform_1(%arg0: i32, %arg1: i32) -> i32 {
    %c0_i32 = arith.constant 0 : i32
    %c0_i32_0 = arith.constant 0 : i32
    return %c0_i32 : i32
  }
  func.func @transform_2(%arg0: i32, %arg1: i32) -> (i32, i32, i32, i32) {
    %c0_i32 = arith.constant 0 : i32
    %c0_i32_0 = arith.constant 0 : i32
    %c0_i32_1 = arith.constant 0 : i32
    return %arg0, %c0_i32, %arg1, %c0_i32_0 : i32, i32, i32, i32
  }
  func.func @transform_3(%arg0: i32, %arg1: i32) -> (i32, i32, i32, i32) {
    %c0_i32 = arith.constant 0 : i32
    %c0_i32_0 = arith.constant 0 : i32
    %c0_i32_1 = arith.constant 0 : i32
    return %arg0, %c0_i32, %arg1, %c0_i32_0 : i32, i32, i32, i32
  }
}

</mosaic_0001>

<llo_original>
// kernel: tpu_custom_call.1
$region0: #{tpu_custom_call.1}
  #allocation0 [shape = 'u32[]', space=smem, size = 0x4, offset = 0x4, fixed_abs, tag = 'smem constant byte address 0x4 - core index']
  #allocation1 [shape = 'u32[144,128]{1,0:T(1,128)}', space=vmem, size = 0x12000, scoped, tag = 'internal scratch']
  %s0 = inlined_call_operand.hbm [shape: f32[3,4], index: 0, kind: input, shape index: {}]
  %s1 = inlined_call_operand.vmem [shape: f32[3], index: 1, kind: input, shape index: {}]
  %s2 = inlined_call_operand.hbm [shape: f32[2,4,4,128], index: 2, kind: input, shape index: {}]
  %s3 = inlined_call_operand.hbm [shape: f32[2,3,4,128], index: 3, kind: output, shape index: {}]
  %s4 = sld [smem:[#allocation0]]
  $region57: #{tpu_custom_call.1} parent=0
    _
  %s6 = ssub.s32 1, %s4
  %s7 = scalar_select 0, %s6, %s4
  $region1: #{tpu_custom_call.1} parent=0
    #allocation2 [shape = 'u8[2048]{0}', space=smem, size = 0x800, scoped, tag = 'input window, operand 0, single buffered']
    #allocation3 [shape = 's32[2]{0}', space=sflag, size = 0x8, scoped, tag = 'scoped memory for tpu_custom_call.1']
    #allocation4 [shape = 's32[2]{0}', space=sflag, size = 0x8, scoped, tag = 'scoped memory for tpu_custom_call.1']
    #allocation5 [shape = 's32[2]{0}', space=sflag, size = 0x8, scoped, tag = 'scoped memory for tpu_custom_call.1']
    #allocation6 [shape = 's32[2]{0}', space=sflag, size = 0x8, scoped, tag = 'scoped memory for tpu_custom_call.1']
    #allocation7 [shape = 'u8[512]{0}', space=smem, size = 0x200, scoped, tag = 'input window, operand 1, single buffered']
    #allocation8 [shape = 'u8[16384]{0}', space=vmem, size = 0x4000, scoped, tag = 'input window, operand 2']
    #allocation9 [shape = 'u8[12288]{0}', space=vmem, size = 0x3000, scoped, tag = 'output window, operand 0']
    %8 = vsyncpa [#allocation5], 0
    %9 = vsyncpa [#allocation6], 0
    %10 = vsyncpa [#allocation3], 0
    %s11 = scalar_lea.sflag [#allocation3], 1
    %12 = vsyncpa %s11, 0
    %13 = vsyncpa [#allocation4], 0
    %s14 = scalar_lea.sflag [#allocation4], 1
    %15 = vsyncpa %s14, 0
    loop: start=0, step=1, limit=4
    $region2: #{tpu_custom_call.1} parent=1 // loop_pre_header
      _
    $region3: #{tpu_custom_call.1} parent=1 // loop_header
      %s17 = sphi 0, %s21
      %p18 = scmp.ge.s32.totalorder %s17, 4
      %s24 = sphi 0, %s36
      %s25 = sphi 0, %s32
      %s26 = sphi 0, %s24
      %s27 = sphi 0, %s25
      %s28 = sphi 0, %s26
      %s29 = sphi 0, %s27
      %s37 = sphi 0, %s37
      %s39 = sphi 0, %s37
      %s40 = sphi 0, %s39
      %s54 = sphi 0, %s40
      %s58 = sphi 0, %s58
      %s60 = sphi 0, %s58
      %s61 = sphi 0, %s60
      %s75 = sphi 0, %s61
      %s83 = sphi 0, %s85
      %s86 = sphi 0, %s83
      %s87 = sphi 0, %s86
      %s103 = sphi 0, %s87
      %s111 = sphi 0, %s113
      %s114 = sphi 0, %s111
      %s115 = sphi 0, %s114
      %s131 = sphi 0, %s115
    $region4: #{tpu_custom_call.1} parent=1 // loop_header_branch
      %20 = sbr.rel (%p18) target = $region8
    $region5: #{tpu_custom_call.1} parent=1 // loop_body
      %s22 = ssub.s32 %s17, 1
      %s23 = ssub.s32 %s17, 2
      %s30 = sadd.s32 1, %s25
      %p31 = scmp.ge.s32.totalorder %s30, 1
      %s32 = scalar_select %p31, 0, %s30
      %s33 = sadd.s32 1, %s24
      %s34 = scalar_select %p31, %s33, %s24
      %p35 = scmp.ge.s32.totalorder %s34, 2
      %s36 = scalar_select %p35, 0, %s34
      %s38 = sadd.s32 %s37, 1
      %p41 = scmp.eq.s32.totalorder %s17, 1
      %p42 = scmp.ne.s32.totalorder %s37, %s39
      %p43 = scmp.eq.s32.totalorder %s17, 0
      %p44 = por %p42, %p43
      %p45 = scmp.ne.s32.totalorder %s37, %s39
      %p46 = scmp.eq.s32.totalorder %s22, 1
      %p47 = por %p45, %p46
      %p48 = scmp.ne.s32.totalorder %s39, %s40
      %p49 = scmp.eq.s32.totalorder %s22, 0
      %p50 = por %p48, %p49
      %p51 = scmp.ne.s32.totalorder %s39, %s40
      %p52 = scmp.eq.s32.totalorder %s23, 1
      %p53 = por %p51, %p52
      %p55 = scmp.ne.s32.totalorder %s40, %s54
      %p56 = scmp.eq.s32.totalorder %s23, 0
      %p57 = por %p55, %p56
      %s59 = sadd.s32 %s58, 1
      %p62 = scmp.eq.s32.totalorder %s17, 1
      %p63 = scmp.ne.s32.totalorder %s58, %s60
      %p64 = scmp.eq.s32.totalorder %s17, 0
      %p65 = por %p63, %p64
      %p66 = scmp.ne.s32.totalorder %s58, %s60
      %p67 = scmp.eq.s32.totalorder %s22, 1
      %p68 = por %p66, %p67
      %p69 = scmp.ne.s32.totalorder %s60, %s61
      %p70 = scmp.eq.s32.totalorder %s22, 0
      %p71 = por %p69, %p70
      %p72 = scmp.ne.s32.totalorder %s60, %s61
      %p73 = scmp.eq.s32.totalorder %s23, 1
      %p74 = por %p72, %p73
      %p76 = scmp.ne.s32.totalorder %s61, %s75
      %p77 = scmp.eq.s32.totalorder %s23, 0
      %p78 = por %p76, %p77
      %s79 = ssub.s32 %s24, %s36
      %s80 = ssub.s32 %s25, %s32
      %s81 = sor.u32 %s79, %s80
      %p82 = scmp.eq.s32.totalorder %s81, 0
      %s84 = sadd.s32 %s83, 1
      %s85 = scalar_select %p82, %s83, %s84
      %p88 = pneg %p82
      %p89 = scmp.eq.s32.totalorder %s17, 1
      %p90 = por %p88, %p89
      %p91 = scmp.ne.s32.totalorder %s83, %s86
      %p92 = scmp.eq.s32.totalorder %s17, 0
      %p93 = por %p91, %p92
      %p94 = scmp.ne.s32.totalorder %s83, %s86
      %p95 = scmp.eq.s32.totalorder %s22, 1
      %p96 = por %p94, %p95
      %p97 = scmp.ne.s32.totalorder %s86, %s87
      %p98 = scmp.eq.s32.totalorder %s22, 0
      %p99 = por %p97, %p98
      %p100 = scmp.ne.s32.totalorder %s86, %s87
      %p101 = scmp.eq.s32.totalorder %s23, 1
      %p102 = por %p100, %p101
      %p104 = scmp.ne.s32.totalorder %s87, %s103
      %p105 = scmp.eq.s32.totalorder %s23, 0
      %p106 = por %p104, %p105
      %s107 = ssub.s32 %s24, %s36
      %s108 = ssub.s32 %s25, %s32
      %s109 = sor.u32 %s107, %s108
      %p110 = scmp.eq.s32.totalorder %s109, 0
      %s112 = sadd.s32 %s111, 1
      %s113 = scalar_select %p110, %s111, %s112
      %p116 = pneg %p110
      %p117 = scmp.eq.s32.totalorder %s17, 1
      %p118 = por %p116, %p117
      %p119 = scmp.ne.s32.totalorder %s111, %s114
      %p120 = scmp.eq.s32.totalorder %s17, 0
      %p121 = por %p119, %p120
      %p122 = scmp.ne.s32.totalorder %s111, %s114
      %p123 = scmp.eq.s32.totalorder %s22, 1
      %p124 = por %p122, %p123
      %p125 = scmp.ne.s32.totalorder %s114, %s115
      %p126 = scmp.eq.s32.totalorder %s22, 0
      %p127 = por %p125, %p126
      %p128 = scmp.ne.s32.totalorder %s114, %s115
      %p129 = scmp.eq.s32.totalorder %s23, 1
      %p130 = por %p128, %p129
      %p132 = scmp.ne.s32.totalorder %s115, %s131
      %p133 = scmp.eq.s32.totalorder %s23, 0
      %p134 = por %p132, %p133
      %p135 = scmp.le.s32.totalorder 1, %s17
      %p136 = scmp.lt.s32.totalorder %s17, 3
      %p137 = pnand %p135, %p136
      %p138 = pneg %p137
      // Predicated region
      $region9: #{tpu_custom_call.1} parent=5 // pred_check
        _
      $region10: #{tpu_custom_call.1} parent=5 // pred_check_branch
        %140 = sbr.rel (%p137) target = $region12
      $region11: #{tpu_custom_call.1} parent=5 // pred_region
        %s141 = ssub.s32 %s17, 1
        // Predicated region
        $region13: #{tpu_custom_call.1} parent=11 // pred_check
          %p142 = pneg %p50
        $region14: #{tpu_custom_call.1} parent=11 // pred_check_branch
          %144 = sbr.rel (%p142) target = $region16
        $region15: #{tpu_custom_call.1} parent=11 // pred_region
          %s146 = ssub.s32 64, 64
          %147 = vsyncadd [#allocation5], %s146
          %150 = dma.hbm_to_smem %s0, 64, [#allocation2], [#allocation5]
        $region16: #{tpu_custom_call.1} parent=11 // pred_fallthru
          _
        // Predicated region
        $region17: #{tpu_custom_call.1} parent=11 // pred_check
          %p151 = pneg %p71
        $region18: #{tpu_custom_call.1} parent=11 // pred_check_branch
          %153 = sbr.rel (%p151) target = $region20
        $region19: #{tpu_custom_call.1} parent=11 // pred_region
          %s155 = ssub.s32 16, 16
          %156 = vsyncadd [#allocation6], %s155
          %s158 = sshll.u32 %s1, 4
          %s159 = int_to_ptr.vmem [resolvable:$true] %s158
          %161 = dma.vmem_to_smem %s159, 16, [#allocation7], [#allocation6]
        $region20: #{tpu_custom_call.1} parent=11 // pred_fallthru
          _
      $region12: #{tpu_custom_call.1} parent=5 // pred_fallthru
        _
      %p162 = scmp.lt.s32.totalorder %s17, 2
      // Predicated region
      $region21: #{tpu_custom_call.1} parent=5 // pred_check
        %p163 = pneg %p162
      $region22: #{tpu_custom_call.1} parent=5 // pred_check_branch
        %165 = sbr.rel (%p163) target = $region24
      $region23: #{tpu_custom_call.1} parent=5 // pred_region
        // Predicated region
        $region25: #{tpu_custom_call.1} parent=23 // pred_check
          %p166 = pneg %p93
        $region26: #{tpu_custom_call.1} parent=23 // pred_check_branch
          %168 = sbr.rel (%p166) target = $region28
        $region27: #{tpu_custom_call.1} parent=23 // pred_region
          %s169 = sand.u32 %s83, 1
          %s170 = scalar_lea.sflag [#allocation3], %s169
          %s171 = sand.u32 %s83, 1
          %s172 = smul.addr %s171, 16
          %s173 = scalar_lea.vmem [#allocation8], %s172
          %s175 = ssub.s32 256, 256
          %176 = vsyncadd %s170, %s175
          %s177 = smul.addr %s24, 4
          %s178 = sadd.s32 %s25, %s177
          %s179 = smul.addr %s178, 64
          %s180 = scalar_lea.hbm %s2, %s179
          %s181 = sshll.u32 %s173, 4
          %s182 = int_to_ptr.vmem [resolvable:$true] %s181
          %187 = dma.hbm_to_vmem [thread:$0]  %s180, 256, %s182, %s170, 64, 64, 4
        $region28: #{tpu_custom_call.1} parent=23 // pred_fallthru
          _
      $region24: #{tpu_custom_call.1} parent=5 // pred_fallthru
        _
      %p188 = scmp.le.s32.totalorder 1, %s17
      %p189 = scmp.lt.s32.totalorder %s17, 3
      %p190 = pnand %p188, %p189
      %p191 = pneg %p190
      // Predicated region
      $region29: #{tpu_custom_call.1} parent=5 // pred_check
        _
      $region30: #{tpu_custom_call.1} parent=5 // pred_check_branch
        %193 = sbr.rel (%p190) target = $region32
      $region31: #{tpu_custom_call.1} parent=5 // pred_region
        %s194 = ssub.s32 %s17, 1
        // Predicated region
        $region33: #{tpu_custom_call.1} parent=31 // pred_check
          %p195 = pneg %p50
        $region34: #{tpu_custom_call.1} parent=31 // pred_check_branch
          %197 = sbr.rel (%p195) target = $region36
        $region35: #{tpu_custom_call.1} parent=31 // pred_region
          %198 = dma.done [#allocation5], 64
        $region36: #{tpu_custom_call.1} parent=31 // pred_fallthru
          _
        // Predicated region
        $region37: #{tpu_custom_call.1} parent=31 // pred_check
          %p199 = pneg %p71
        $region38: #{tpu_custom_call.1} parent=31 // pred_check_branch
          %201 = sbr.rel (%p199) target = $region40
        $region39: #{tpu_custom_call.1} parent=31 // pred_region
          %202 = dma.done [#allocation6], 16
        $region40: #{tpu_custom_call.1} parent=31 // pred_fallthru
          _
        %s203 = sand.u32 %s86, 1
        %s204 = scalar_lea.sflag [#allocation3], %s203
        %s205 = sand.u32 %s86, 1
        %s206 = smul.addr %s205, 16
        %s207 = scalar_lea.vmem [#allocation8], %s206
        // Predicated region
        $region41: #{tpu_custom_call.1} parent=31 // pred_check
          %p208 = pneg %p99
        $region42: #{tpu_custom_call.1} parent=31 // pred_check_branch
          %210 = sbr.rel (%p208) target = $region44
        $region43: #{tpu_custom_call.1} parent=31 // pred_region
          %211 = dma.done %s204, 256
        $region44: #{tpu_custom_call.1} parent=31 // pred_fallthru
          _
        %212 = sfence
        %p213 = pneg %p50
        %p214 = pneg %p47
        %p215 = pneg %p71
        %p216 = pneg %p68
        %s217 = sand.u32 %s86, 1
        %s218 = scalar_lea.sflag [#allocation3], %s217
        %s219 = sand.u32 %s86, 1
        %s220 = smul.addr %s219, 16
        %s221 = scalar_lea.vmem [#allocation8], %s220
        %p222 = pneg %p99
        %p223 = pneg %p96
        %p224 = pneg %p127
        %p225 = pneg %p124
        %s226 = sand.u32 %s114, 1
        %s227 = scalar_lea.sflag [#allocation4], %s226
        %s228 = sand.u32 %s114, 1
        %s229 = smul.addr %s228, 12
        %s230 = scalar_lea.vmem [#allocation9], %s229
        %v231 = vld [vmem:[%s207] sm:$0xf]
        %s232 = sld [smem:[#allocation2]]
        %v233 = vstv %s232
        %v234 = vmul.f32 %v231, %v233
        %s235 = scalar_lea.vmem %s207, 4 [#allocation8]
        %v236 = vld [vmem:[%s235] sm:$0xf]
        %s237 = sld [smem:[#allocation2 + $0x1]]
        %v238 = vstv %s237
        %v239 = vmul.f32 %v236, %v238
        %v240 = vadd.f32 %v234, %v239
        %s241 = scalar_lea.vmem %s207, 8 [#allocation8]
        %v242 = vld [vmem:[%s241] sm:$0xf]
        %s243 = sld [smem:[#allocation2 + $0x2]]
        %v244 = vstv %s243
        %v245 = vmul.f32 %v242, %v244
        %v246 = vadd.f32 %v240, %v245
        %s247 = scalar_lea.vmem %s207, 12 [#allocation8]
        %v248 = vld [vmem:[%s247] sm:$0xf]
        %s249 = sld [smem:[#allocation2 + $0x3]]
        %v250 = vstv %s249
        %v251 = vmul.f32 %v248, %v250
        %v252 = vadd.f32 %v246, %v251
        %s253 = sld [smem:[#allocation7]]
        %v254 = vstv %s253
        %v255 = vadd.f32 %v252, %v254
        %256 = vst [vmem:[%s230] sm:$0xf] %v255
        %v257 = vld [vmem:[%s207] sm:$0xf]
        %s258 = sld [smem:[#allocation2 + $0x80]]
        %v259 = vstv %s258
        %v260 = vmul.f32 %v257, %v259
        %v261 = vld [vmem:[%s235] sm:$0xf]
        %s262 = sld [smem:[#allocation2 + $0x81]]
        %v263 = vstv %s262
        %v264 = vmul.f32 %v261, %v263
        %v265 = vadd.f32 %v260, %v264
        %v266 = vld [vmem:[%s241] sm:$0xf]
        %s267 = sld [smem:[#allocation2 + $0x82]]
        %v268 = vstv %s267
        %v269 = vmul.f32 %v266, %v268
        %v270 = vadd.f32 %v265, %v269
        %v271 = vld [vmem:[%s247] sm:$0xf]
        %s272 = sld [smem:[#allocation2 + $0x83]]
        %v273 = vstv %s272
        %v274 = vmul.f32 %v271, %v273
        %v275 = vadd.f32 %v270, %v274
        %s276 = sld [smem:[#allocation7 + $0x1]]
        %v277 = vstv %s276
        %v278 = vadd.f32 %v275, %v277
        %s279 = scalar_lea.vmem %s230, 4 [#allocation9]
        %280 = vst [vmem:[%s279] sm:$0xf] %v278
        %v281 = vld [vmem:[%s207] sm:$0xf]
        %s282 = sld [smem:[#allocation2 + $0x100]]
        %v283 = vstv %s282
        %v284 = vmul.f32 %v281, %v283
        %v285 = vld [vmem:[%s235] sm:$0xf]
        %s286 = sld [smem:[#allocation2 + $0x101]]
        %v287 = vstv %s286
        %v288 = vmul.f32 %v285, %v287
        %v289 = vadd.f32 %v284, %v288
        %v290 = vld [vmem:[%s241] sm:$0xf]
        %s291 = sld [smem:[#allocation2 + $0x102]]
        %v292 = vstv %s291
        %v293 = vmul.f32 %v290, %v292
        %v294 = vadd.f32 %v289, %v293
        %v295 = vld [vmem:[%s247] sm:$0xf]
        %s296 = sld [smem:[#allocation2 + $0x103]]
        %v297 = vstv %s296
        %v298 = vmul.f32 %v295, %v297
        %v299 = vadd.f32 %v294, %v298
        %s300 = sld [smem:[#allocation7 + $0x2]]
        %v301 = vstv %s300
        %v302 = vadd.f32 %v299, %v301
        %s303 = scalar_lea.vmem %s230, 8 [#allocation9]
        %304 = vst [vmem:[%s303] sm:$0xf] %v302
        %s305 = sand.u32 %s114, 1
        %s306 = scalar_lea.sflag [#allocation4], %s305
        %s307 = sand.u32 %s114, 1
        %s308 = smul.addr %s307, 12
        %s309 = scalar_lea.vmem [#allocation9], %s308
        // Predicated region
        $region45: #{tpu_custom_call.1} parent=31 // pred_check
          %p310 = pneg %p124
        $region46: #{tpu_custom_call.1} parent=31 // pred_check_branch
          %312 = sbr.rel (%p310) target = $region48
        $region47: #{tpu_custom_call.1} parent=31 // pred_region
          %s314 = ssub.s32 192, 192
          %315 = vsyncadd %s306, %s314
          %s316 = smul.addr %s26, 3
          %s317 = sadd.s32 %s27, %s316
          %s318 = smul.addr %s317, 64
          %s319 = scalar_lea.hbm %s3, %s318
          %s320 = sshll.u32 %s309, 4
          %s321 = int_to_ptr.vmem [resolvable:$true] %s320
          %326 = dma.vmem_to_hbm [thread:$0]  %s321, 192, %s319, %s306, 64, 64, 4
        $region48: #{tpu_custom_call.1} parent=31 // pred_fallthru
          _
      $region32: #{tpu_custom_call.1} parent=5 // pred_fallthru
        _
      %p327 = scmp.le.s32.totalorder 2, %s17
      // Predicated region
      $region49: #{tpu_custom_call.1} parent=5 // pred_check
        %p328 = pneg %p327
      $region50: #{tpu_custom_call.1} parent=5 // pred_check_branch
        %330 = sbr.rel (%p328) target = $region52
      $region51: #{tpu_custom_call.1} parent=5 // pred_region
        %s331 = ssub.s32 %s17, 2
        // Predicated region
        $region53: #{tpu_custom_call.1} parent=51 // pred_check
          %p332 = pneg %p130
        $region54: #{tpu_custom_call.1} parent=51 // pred_check_branch
          %334 = sbr.rel (%p332) target = $region56
        $region55: #{tpu_custom_call.1} parent=51 // pred_region
          %s335 = sand.u32 %s115, 1
          %s336 = scalar_lea.sflag [#allocation4], %s335
          %s337 = sand.u32 %s115, 1
          %s338 = smul.addr %s337, 12
          %s339 = scalar_lea.vmem [#allocation9], %s338
          %340 = dma.done %s336, 192
        $region56: #{tpu_custom_call.1} parent=51 // pred_fallthru
          _
      $region52: #{tpu_custom_call.1} parent=5 // pred_fallthru
        _
    $region6: #{tpu_custom_call.1} parent=1 // loop_footer
      %s21 = sadd.s32 1, %s17
    $region7: #{tpu_custom_call.1} parent=1 // loop_footer_branch
      %16 = sbr.rel target = $region3
    $region8: #{tpu_custom_call.1} parent=1 // loop_exit
      _
    %341 = vsyncpa [#allocation3], 1
    %s342 = scalar_lea.sflag [#allocation3], 1
    %343 = vsyncpa %s342, 1
    %344 = vsyncpa [#allocation4], 1
    %s345 = scalar_lea.sflag [#allocation4], 1
    %346 = vsyncpa %s345, 1
    %347 = vsyncpa [#allocation5], 1
    %s348 = scalar_lea.sflag [#allocation5], 1
    %349 = vsyncpa %s348, 1
    %350 = vsyncpa [#allocation6], 1
    %s351 = scalar_lea.sflag [#allocation6], 1
    %352 = vsyncpa %s351, 1

</llo_original>
